<compile_context>
chip_gen: v6e
topology: v6e:2x2x1
jax: 0.10.0
libtpu: 0.0.40
codegen_flags: <defaults>
</compile_context>

<pallas_src>
import functools

import jax
import jax.numpy as jnp
from jax.experimental import pallas as pl
from jax.experimental.pallas import tpu as pltpu

_MiB = 1024 * 1024
_LANE_CANDIDATES = (4096, 2048, 1024, 512, 256, 128)


def _chip_config():
    """Returns (block_bytes, vmem_limit_bytes_or_None, min_blocks, bf16_compute_ok)."""
    kind = ""
    try:
        kind = jax.devices()[0].device_kind.lower()
    except Exception:  # pragma: no cover - defensive, fall through to defaults
        pass
    if "v7" in kind or "7x" in kind:
        # v7x: ~3.2 TB/s HBM, 2 TensorCores, 64 MiB VMEM/TC (32 MiB scoped
        # default). 8 MiB blocks -> 4 double-buffered tiles = 32 MiB, so raise
        # the scoped limit to 48 MiB; also force >=4 blocks so both TCs work.
        return 8 * _MiB, 48 * _MiB, 4, True
    if "v6" in kind or "6e" in kind:
        # v6e: 4 MiB blocks -> 16 MiB of buffers, inside the 32 MiB default.
        return 4 * _MiB, None, 1, True
    # v5e / v5p / unknown: 2 MiB blocks -> 8 MiB of buffers, inside the 16 MiB
    # scoped default; v5e has no bf16 VPU/EUP so keep f32 compute.
    return 2 * _MiB, None, 1, False


def _swish_kernel(x_ref, o_ref, *, compute_dtype):
    # Elementwise swish on one VMEM tile; compute dtype chosen by the wrapper,
    # I/O stays in the caller's dtype.
    xf = x_ref[...].astype(compute_dtype)
    # sigmoid(x) = 1 / (1 + exp(-x)); exact reciprocal (HBM-bound kernel, the
    # EUP approx would be neutral and would loosen accuracy).
    sig = pl.reciprocal(1.0 + jnp.exp(-xf), approx=False)
    o_ref[...] = (xf * sig).astype(o_ref.dtype)


def _swish_lane_dense(x_flat, lane, *, inplace=False):
    """Run the kernel on a 1-D array whose size is a multiple of `lane`."""
    n = x_flat.size
    dtype = x_flat.dtype
    rows = n // lane
    x2d = x_flat.reshape(rows, lane)  # metadata-only reshape, no HBM copy

    block_bytes, vmem_limit, min_blocks, bf16_ok = _chip_config()
    compute_dtype = (jnp.bfloat16
                     if (bf16_ok and dtype == jnp.bfloat16) else jnp.float32)

    bytes_per_row = lane * jnp.dtype(dtype).itemsize
    total_bytes = rows * bytes_per_row
    target_rows = max(8, (block_bytes // bytes_per_row) // 8 * 8)

    # On v7x (min_blocks=4) make sure mid/large tensors split into >=4
    # balanced multiple-of-8 blocks so the "parallel" grid axis keeps both
    # TensorCores busy on this purely bandwidth-bound kernel.
    if min_blocks > 1 and total_bytes > 2 * _MiB and rows >= 8 * min_blocks:
        cap = max(8, (rows // min_blocks) // 8 * 8)
        target_rows = min(target_rows, cap)

    if rows <= target_rows:
        # Single block equal to the full array: no (8,128) divisibility needed.
        tile_rows = rows
        grid = (1,)
    else:
        # Multiple-of-8 row tiles; a partial last block is masked by Pallas.
        tile_rows = target_rows
        grid = (pl.cdiv(rows, tile_rows),)

    compiler_kwargs = dict(dimension_semantics=("parallel",))
    if vmem_limit is not None:
        compiler_kwargs["vmem_limit_bytes"] = vmem_limit

    out = pl.pallas_call(
        functools.partial(_swish_kernel, compute_dtype=compute_dtype),
        out_shape=jax.ShapeDtypeStruct((rows, lane), dtype),
        grid_spec=pltpu.PrefetchScalarGridSpec(
            num_scalar_prefetch=0,
            grid=grid,
            in_specs=[pl.BlockSpec((tile_rows, lane), lambda i: (i, 0))],
            out_specs=pl.BlockSpec((tile_rows, lane), lambda i: (i, 0)),
        ),
        compiler_params=pltpu.CompilerParams(**compiler_kwargs),
        # Optional in-place: reuses x's HBM buffer for the output when the
        # caller donates x (otherwise XLA inserts a copy and it is a no-op).
        input_output_aliases=({0: 0} if inplace else {}),
    )(x2d)
    return out.reshape(-1)


def swish(x, *, inplace=False):
    """Elementwise swish (x * sigmoid(x)); layout-agnostic, dtype-preserving."""
    orig_shape = x.shape
    n = x.size
    if n == 0:
        return x
    x_flat = x.reshape(-1)  # free reshape of a contiguous array

    if n % 128 == 0:
        # Fast path: no padding, no stripping, no extra HBM copies.
        lane = next(c for c in _LANE_CANDIDATES if n % c == 0)
        return _swish_lane_dense(x_flat, lane, inplace=inplace).reshape(orig_shape)

    # Rare ragged path (numel not a multiple of 128): bulk + tail instead of
    # pad + strip, so we never pay two extra full-tensor HBM passes.
    n_bulk = (n // 128) * 128
    if n_bulk == 0:
        # Fewer than 128 elements total: not worth a kernel launch.
        return (x_flat * jax.nn.sigmoid(x_flat)).reshape(orig_shape)
    lane = next(c for c in _LANE_CANDIDATES if n_bulk % c == 0)
    bulk = _swish_lane_dense(x_flat[:n_bulk], lane)
    tail = x_flat[n_bulk:]
    tail = tail * jax.nn.sigmoid(tail)  # <= 127 elements, plain VPU work
    return jnp.concatenate([bulk, tail]).reshape(orig_shape)


if __name__ == "__main__":
    key = jax.random.PRNGKey(0)
    # NCHW input, matching a typical conv activation in yolov3.
    x = jax.random.normal(key, (2, 4, 16, 16), dtype=jnp.float32)

    y = swish(x)
    y = jax.block_until_ready(y)

    # Reference check in plain JAX (f32 path -> exact sigmoid, tight tolerance).
    y_ref = x * jax.nn.sigmoid(x)
    assert y.shape == x.shape and y.dtype == x.dtype
    assert jnp.allclose(y, y_ref, atol=1e-6, rtol=1e-6)

    # Also exercise the ragged bulk+tail path once (small, cheap).
    x2 = jax.random.normal(jax.random.PRNGKey(1), (5, 7, 11), dtype=jnp.float32)
    y2 = jax.block_until_ready(swish(x2))
    assert jnp.allclose(y2, x2 * jax.nn.sigmoid(x2), atol=1e-6, rtol=1e-6)

    print("KERNEL_OK")
</pallas_src>

<mosaic_0001>
module attributes {stable_mosaic.version = 11 : i64} {
  func.func @_swish_kernel(%arg0: i32, %arg1: memref<1x2048xf32, #tpu.memory_space<vmem>>, %arg2: memref<1x2048xf32, #tpu.memory_space<vmem>>) attributes {dimension_semantics = [#tpu.dimension_semantics<parallel>], iteration_bounds = array<i64: 1>, scalar_prefetch = 0 : i64, scratch_operands = 0 : i64, tpu.core_type = #tpu.core_type<tc>, window_params = [{transform_indices = @transform_0, window_bounds = array<i64: 1, 2048>}, {transform_indices = @transform_1, window_bounds = array<i64: 1, 2048>}]} {
    %c0 = arith.constant 0 : index
    %c0_0 = arith.constant 0 : index
    %0 = vector.load %arg1[%c0, %c0_0] : memref<1x2048xf32, #tpu.memory_space<vmem>>, vector<1x2048xf32>
    %cst = arith.constant 0.000000e+00 : f32
    %1 = vector.broadcast %cst : f32 to vector<1x2048xf32>
    %2 = arith.subf %1, %0 : vector<1x2048xf32>
    %3 = math.exp %2 : vector<1x2048xf32>
    %cst_1 = arith.constant 1.000000e+00 : f32
    %4 = vector.broadcast %cst_1 : f32 to vector<1x2048xf32>
    %5 = arith.addf %4, %3 : vector<1x2048xf32>
    %6 = tpu.reciprocal %5 : vector<1x2048xf32> -> vector<1x2048xf32>
    %7 = arith.mulf %0, %6 : vector<1x2048xf32>
    %c0_2 = arith.constant 0 : index
    %c0_3 = arith.constant 0 : index
    %8 = vector.load %arg2[%c0_2, %c0_3] : memref<1x2048xf32, #tpu.memory_space<vmem>>, vector<1x2048xf32>
    tpu.vector_store %arg2[%c0_2, %c0_3], %7 {strides = array<i32>} : memref<1x2048xf32, #tpu.memory_space<vmem>>, vector<1x2048xf32>,
    return
  }
  func.func @transform_0(%arg0: i32) -> (i32, i32) {
    %c0_i32 = arith.constant 0 : i32
    %c0_i32_0 = arith.constant 0 : i32
    return %arg0, %c0_i32 : i32, i32
  }
  func.func @transform_1(%arg0: i32) -> (i32, i32) {
    %c0_i32 = arith.constant 0 : i32
    %c0_i32_0 = arith.constant 0 : i32
    return %arg0, %c0_i32 : i32, i32
  }
}

</mosaic_0001>

<llo_original>
// kernel: tpu_custom_call.1
$region0: #{tpu_custom_call.1}
  #allocation0 [shape = 'u32[]', space=smem, size = 0x4, offset = 0x4, fixed_abs, tag = 'smem constant byte address 0x4 - core index']
  #allocation1 [shape = 'u32[144,128]{1,0:T(1,128)}', space=vmem, size = 0x12000, scoped, tag = 'internal scratch']
  %s0 = inlined_call_operand.hbm [shape: f32[1,2048], index: 0, kind: input, shape index: {}]
  %s1 = inlined_call_operand.hbm [shape: f32[1,2048], index: 1, kind: output, shape index: {}]
  %s2 = sld [smem:[#allocation0]]
  $region18: #{tpu_custom_call.1} parent=0
    _
  %s4 = ssub.s32 1, %s2
  %s5 = scalar_select 0, %s4, %s2
  $region1: #{tpu_custom_call.1} parent=0
    #allocation2 [shape = 'u8[8192]{0}', space=vmem, size = 0x2000, scoped, tag = 'input window, operand 0, single buffered']
    #allocation3 [shape = 's32[1]{0}', space=sflag, size = 0x4, scoped, tag = 'scoped memory for tpu_custom_call.1']
    #allocation4 [shape = 's32[1]{0}', space=sflag, size = 0x4, scoped, tag = 'scoped memory for tpu_custom_call.1']
    #allocation5 [shape = 'u8[8192]{0}', space=vmem, size = 0x2000, scoped, tag = 'output window, operand 0, single buffered']
    %6 = vsyncpa [#allocation3], 0
    %7 = vsyncpa [#allocation4], 0
    // Predicated region
    $region2: #{tpu_custom_call.1} parent=1 // pred_check
      _
    $region3: #{tpu_custom_call.1} parent=1 // pred_check_branch
      %9 = sbr.rel (0) target = $region5
    $region4: #{tpu_custom_call.1} parent=1 // pred_region
      %s11 = ssub.s32 256, 256
      %12 = vsyncadd [#allocation3], %s11
      %s14 = sshll.u32 [#allocation2], 4
      %s15 = int_to_ptr.vmem [resolvable:$true] %s14
      %17 = dma.hbm_to_vmem [thread:$0]  %s0, 256, %s15, [#allocation3]
    $region5: #{tpu_custom_call.1} parent=1 // pred_fallthru
      _
    // Predicated region
    $region6: #{tpu_custom_call.1} parent=1 // pred_check
      _
    $region7: #{tpu_custom_call.1} parent=1 // pred_check_branch
      %19 = sbr.rel (0) target = $region9
    $region8: #{tpu_custom_call.1} parent=1 // pred_region
      %20 = dma.done [#allocation3], 256
    $region9: #{tpu_custom_call.1} parent=1 // pred_fallthru
      _
    %v21 = vld [vmem:[#allocation2] sm:$0xff]
    %v22 = vld [vmem:[#allocation2 + $0x8] sm:$0xff]
    %v23 = vsub.f32 0.0, %v21
    %v24 = vsub.f32 0.0, %v22
    %v25 = vmul.f32 %v23, 1.442695
    %v26 = vpow.pop %v25
    %v27 = vmul.f32 %v24, 1.442695
    %v28 = vpow.pop %v27
    %v29 = vadd.f32 %v26, 1.0
    %v30 = vadd.f32 %v28, 1.0
    %v31 = vrcp.pop %v29
    %v32 = vrcp.pop %v30
    %v33 = vmul.f32 %v21, %v31
    %v34 = vmul.f32 %v22, %v32
    %35 = vst [vmem:[#allocation5] sm:$0xff] %v33
    %36 = vst [vmem:[#allocation5 + $0x8] sm:$0xff] %v34
    // Predicated region
    $region10: #{tpu_custom_call.1} parent=1 // pred_check
      _
    $region11: #{tpu_custom_call.1} parent=1 // pred_check_branch
      %38 = sbr.rel (0) target = $region13
    $region12: #{tpu_custom_call.1} parent=1 // pred_region
      %s40 = ssub.s32 256, 256
      %41 = vsyncadd [#allocation4], %s40
      %s43 = sshll.u32 [#allocation5], 4
      %s44 = int_to_ptr.vmem [resolvable:$true] %s43
      %46 = dma.vmem_to_hbm [thread:$0]  %s44, 256, %s1, [#allocation4]
    $region13: #{tpu_custom_call.1} parent=1 // pred_fallthru
      _
    // Predicated region
    $region14: #{tpu_custom_call.1} parent=1 // pred_check
      _
    $region15: #{tpu_custom_call.1} parent=1 // pred_check_branch
      %48 = sbr.rel (0) target = $region17
    $region16: #{tpu_custom_call.1} parent=1 // pred_region
      %49 = dma.done [#allocation4], 256
    $region17: #{tpu_custom_call.1} parent=1 // pred_fallthru
      _
    %50 = vsyncpa [#allocation3], 1
    %51 = vsyncpa [#allocation4], 1

</llo_original>
